<compile_context>
chip_gen: v6e
topology: v6e:2x2x1
jax: 0.10.0
libtpu: 0.0.40
codegen_flags: <defaults>
</compile_context>

<pallas_src>
from functools import partial
from itertools import product

import numpy as np
import jax
import jax.numpy as jnp
from jax.experimental import pallas as pl
from jax.experimental.pallas import tpu as pltpu


# ------------------------------------------------------------------
# Pattern generation (numpy port of the PyTorch helpers; host-side glue).
# ------------------------------------------------------------------
def get_bias_pattern(Bs, mm):
    value_range = np.arange(-mm, mm + 1)
    x_combinations = np.array(list(product(value_range, repeat=2)))
    equivalence_classes = {}
    class_counter = 1
    bias_pattern = np.zeros(len(x_combinations), dtype=np.int64)
    for i, x in enumerate(x_combinations):
        transformed_values = []
        for B in Bs:
            X = B @ x
            transformed_values.append((round(float(X[0]), 6), round(float(X[1]), 6)))
        transformed_values = tuple(sorted(transformed_values))
        if transformed_values not in equivalence_classes:
            equivalence_classes[transformed_values] = class_counter
            class_counter += 1
        bias_pattern[i] = equivalence_classes[transformed_values]
    return bias_pattern


def get_weight_pattern(Bs, nn_, mm):
    value_range1 = np.arange(-nn_, nn_ + 1)
    value_range2 = np.arange(-mm, mm + 1)
    x_combinations = np.array(list(product(value_range1, repeat=2)))
    y_combinations = np.array(list(product(value_range2, repeat=2)))
    equivalence_classes = {}
    class_counter = 1
    weight_pattern = np.zeros((len(x_combinations), len(y_combinations)), dtype=np.int64)
    for i, x in enumerate(x_combinations):
        for j, y in enumerate(y_combinations):
            transformed_values = []
            for B in Bs:
                X = B @ x
                Y = B @ y
                transformed_values.append(
                    (round(float(X[0]), 6), round(float(X[1]), 6),
                     round(float(Y[0]), 6), round(float(Y[1]), 6)))
            transformed_values = tuple(sorted(transformed_values))
            if transformed_values not in equivalence_classes:
                equivalence_classes[transformed_values] = class_counter
                class_counter += 1
            weight_pattern[i, j] = equivalence_classes[transformed_values]
    return weight_pattern


def num_unique_nonzero(pattern):
    u = set(np.asarray(pattern).flatten().tolist())
    u.discard(0)
    return len(u)


def build_dense_weight(pattern, params):
    """weight[pattern>0] = params[pattern-1]; zeros elsewhere (numpy, host-side)."""
    pattern = np.asarray(pattern)
    params = np.asarray(params, dtype=np.float32)
    idx = np.clip(pattern - 1, 0, None)
    return np.where(pattern > 0, params[idx], 0.0).astype(np.float32)


# ------------------------------------------------------------------
# Padded parameter packing (done once, host-side).
# ------------------------------------------------------------------
D_IN, D_HID, D_OUT = 9, 121, 9
D_IN_PAD, D_HID_PAD, D_OUT_PAD = 16, 128, 16   # narrow (16-lane) output: 8x less writeback


def pack_padded_params(W1, b1, W2, b2, W3, b3):
    """Zero-pad weights/biases to TPU-native tiles. Padding stays exactly 0."""
    W1 = np.asarray(W1, np.float32); b1 = np.asarray(b1, np.float32).reshape(-1)
    W2 = np.asarray(W2, np.float32); b2 = np.asarray(b2, np.float32).reshape(-1)
    W3 = np.asarray(W3, np.float32); b3 = np.asarray(b3, np.float32).reshape(-1)

    W1p = np.zeros((D_IN_PAD, D_HID_PAD), np.float32); W1p[:D_IN, :D_HID] = W1
    b1p = np.zeros((1, D_HID_PAD), np.float32);        b1p[0, :D_HID] = b1
    W2p = np.zeros((D_HID_PAD, D_HID_PAD), np.float32); W2p[:D_HID, :D_HID] = W2
    b2p = np.zeros((1, D_HID_PAD), np.float32);        b2p[0, :D_HID] = b2
    W3p = np.zeros((D_HID_PAD, D_OUT_PAD), np.float32); W3p[:D_HID, :D_OUT] = W3
    b3p = np.zeros((1, D_OUT_PAD), np.float32);        b3p[0, :D_OUT] = b3

    return (jnp.asarray(W1p), jnp.asarray(b1p),
            jnp.asarray(W2p), jnp.asarray(b2p),
            jnp.asarray(W3p), jnp.asarray(b3p))


# ------------------------------------------------------------------
# Pallas kernel: out = relu(relu(x@W1+b1)@W2+b2)@W3+b3 on padded tiles.
# Bias adds are broadcast VPU work hidden under the MXU matmuls.
# ------------------------------------------------------------------
def eqnn_kernel(x_ref, w1_ref, b1_ref, w2_ref, b2_ref, w3_ref, b3_ref, o_ref):
    h1 = jnp.maximum(
        jnp.dot(x_ref[...], w1_ref[...], preferred_element_type=jnp.float32)
        + b1_ref[...], 0.0)
    h2 = jnp.maximum(
        jnp.dot(h1, w2_ref[...], preferred_element_type=jnp.float32)
        + b2_ref[...], 0.0)
    o_ref[...] = (
        jnp.dot(h2, w3_ref[...], preferred_element_type=jnp.float32) + b3_ref[...])


@partial(jax.jit, static_argnames=("tm",))
def _eqnn_forward(x, W1p, b1p, W2p, b2p, W3p, b3p, *, tm):
    """Single fused dispatch: pad -> pallas_call -> slice."""
    B = x.shape[0]
    Bp = -(-B // tm) * tm
    x_pad = jnp.pad(x.astype(jnp.float32), ((0, Bp - B), (0, D_IN_PAD - D_IN)))

    out_pad = pl.pallas_call(
        eqnn_kernel,
        out_shape=jax.ShapeDtypeStruct((Bp, D_OUT_PAD), jnp.float32),
        grid=(Bp // tm,),
        in_specs=[
            pl.BlockSpec((tm, D_IN_PAD), lambda i: (i, 0)),           # streams per tile
            pl.BlockSpec((D_IN_PAD, D_HID_PAD), lambda i: (0, 0)),    # VMEM-resident
            pl.BlockSpec((1, D_HID_PAD), lambda i: (0, 0)),           # VMEM-resident
            pl.BlockSpec((D_HID_PAD, D_HID_PAD), lambda i: (0, 0)),   # VMEM-resident
            pl.BlockSpec((1, D_HID_PAD), lambda i: (0, 0)),           # VMEM-resident
            pl.BlockSpec((D_HID_PAD, D_OUT_PAD), lambda i: (0, 0)),   # VMEM-resident
            pl.BlockSpec((1, D_OUT_PAD), lambda i: (0, 0)),           # VMEM-resident
        ],
        out_specs=pl.BlockSpec((tm, D_OUT_PAD), lambda i: (i, 0)),
        compiler_params=pltpu.CompilerParams(
            dimension_semantics=("parallel",)),   # shards batch across v7x's 2 TCs
    )(x_pad, W1p, b1p, W2p, b2p, W3p, b3p)

    return out_pad[:B, :D_OUT]


# Fixed tm buckets (multiples of 8) -> bounded Mosaic compile churn.
_TM_BUCKETS = (8, 16, 32, 64, 128, 256, 512)


def _select_tm(B):
    if B >= 1024:
        return 512          # >=2 grid steps, big tiles amortize per-step overhead
    if B >= 512:
        return 256          # keeps >=2 grid steps so both v7x TensorCores get work
    for t in _TM_BUCKETS:
        if t >= B:
            return t
    return 512


def equivariant_nn_forward(x, params):
    """x: (B, 9) float32 flattened boards -> (B, 9) output."""
    tm = _select_tm(x.shape[0])
    return _eqnn_forward(x, *params, tm=tm)


# ------------------------------------------------------------------
# Main: build D4 group matrices, tied parameters, run kernel, verify.
# ------------------------------------------------------------------
if __name__ == "__main__":
    # D4 symmetry group of the 3x3 board (rotations + reflections).
    I = np.array([[1, 0], [0, 1]])
    R = np.array([[0, -1], [1, 0]])        # 90-degree rotation
    F = np.array([[1, 0], [0, -1]])        # reflection
    group_matrices = [I, R, R @ R, R @ R @ R, F, R @ F, R @ R @ F, R @ R @ R @ F]

    ms = (1, 5, 5, 1)
    m0, m1, m2, m3 = ms

    wp1 = get_weight_pattern(group_matrices, m0, m1)    # (9, 121)
    bp1 = get_bias_pattern(group_matrices, m1)           # (121,)
    wp2 = get_weight_pattern(group_matrices, m1, m2)     # (121, 121)
    bp2 = get_bias_pattern(group_matrices, m2)            # (121,)
    wp3 = get_weight_pattern(group_matrices, m2, m3)     # (121, 9)
    bp3 = get_bias_pattern(group_matrices, m3)             # (9,)

    key = jax.random.PRNGKey(0)
    k1, k2, k3, kx = jax.random.split(key, 4)

    def init_params(k, wp, bp):
        in_size = wp.shape[0]
        bound = 1.0 / np.sqrt(in_size)
        wparams = jax.random.uniform(
            k, (num_unique_nonzero(wp),), jnp.float32, minval=-bound, maxval=bound)
        bparams = jnp.zeros((num_unique_nonzero(bp),), jnp.float32)
        return np.asarray(wparams), np.asarray(bparams)

    wpar1, bpar1 = init_params(k1, wp1, bp1)
    wpar2, bpar2 = init_params(k2, wp2, bp2)
    wpar3, bpar3 = init_params(k3, wp3, bp3)

    W1 = build_dense_weight(wp1, wpar1)           # (9, 121)
    b1 = build_dense_weight(bp1[None, :], bpar1)  # (1, 121)
    W2 = build_dense_weight(wp2, wpar2)           # (121, 121)
    b2 = build_dense_weight(bp2[None, :], bpar2)  # (1, 121)
    W3 = build_dense_weight(wp3, wpar3)           # (121, 9)
    b3 = build_dense_weight(bp3[None, :], bpar3)  # (1, 9)

    # Pack once into padded device arrays (persistent across calls).
    params = pack_padded_params(W1, b1, W2, b2, W3, b3)

    # Input: small batch of flattened 3x3 boards -> (B, 9); exercises batch padding.
    batch = 50
    x = jax.random.normal(kx, (batch, 9), dtype=jnp.float32)

    out = equivariant_nn_forward(x, params)
    out = jax.block_until_ready(out)

    # Pure-JAX reference check (same math, outside Pallas, unpadded weights).
    W1j, b1j = jnp.asarray(W1), jnp.asarray(b1)
    W2j, b2j = jnp.asarray(W2), jnp.asarray(b2)
    W3j, b3j = jnp.asarray(W3), jnp.asarray(b3)
    h1 = jnp.maximum(x @ W1j + b1j, 0.0)
    h2 = jnp.maximum(h1 @ W2j + b2j, 0.0)
    ref = h2 @ W3j + b3j

    assert out.shape == (batch, 9)
    assert np.allclose(np.asarray(out), np.asarray(ref), atol=1e-4, rtol=1e-4)

    print("KERNEL_OK")
</pallas_src>

<mosaic_0001>
module attributes {stable_mosaic.version = 11 : i64} {
  func.func @eqnn_kernel(%arg0: i32, %arg1: memref<64x16xf32, #tpu.memory_space<vmem>>, %arg2: memref<16x128xf32, #tpu.memory_space<vmem>>, %arg3: memref<1x128xf32, #tpu.memory_space<vmem>>, %arg4: memref<128x128xf32, #tpu.memory_space<vmem>>, %arg5: memref<1x128xf32, #tpu.memory_space<vmem>>, %arg6: memref<128x16xf32, #tpu.memory_space<vmem>>, %arg7: memref<1x16xf32, #tpu.memory_space<vmem>>, %arg8: memref<64x16xf32, #tpu.memory_space<vmem>>) attributes {dimension_semantics = [#tpu.dimension_semantics<parallel>], iteration_bounds = array<i64: 1>, scalar_prefetch = 0 : i64, scratch_operands = 0 : i64, tpu.core_type = #tpu.core_type<tc>, window_params = [{transform_indices = @transform_0, window_bounds = array<i64: 64, 16>}, {pipeline_mode = #tpu.pipeline_mode<synchronous>, transform_indices = @transform_1, window_bounds = array<i64: 16, 128>}, {pipeline_mode = #tpu.pipeline_mode<synchronous>, transform_indices = @transform_2, window_bounds = array<i64: 1, 128>}, {pipeline_mode = #tpu.pipeline_mode<synchronous>, transform_indices = @transform_3, window_bounds = array<i64: 128, 128>}, {pipeline_mode = #tpu.pipeline_mode<synchronous>, transform_indices = @transform_4, window_bounds = array<i64: 1, 128>}, {pipeline_mode = #tpu.pipeline_mode<synchronous>, transform_indices = @transform_5, window_bounds = array<i64: 128, 16>}, {pipeline_mode = #tpu.pipeline_mode<synchronous>, transform_indices = @transform_6, window_bounds = array<i64: 1, 16>}, {transform_indices = @transform_7, window_bounds = array<i64: 64, 16>}]} {
    %c0 = arith.constant 0 : index
    %c0_0 = arith.constant 0 : index
    %0 = vector.load %arg1[%c0, %c0_0] : memref<64x16xf32, #tpu.memory_space<vmem>>, vector<64x16xf32>
    %c0_1 = arith.constant 0 : index
    %c0_2 = arith.constant 0 : index
    %1 = vector.load %arg2[%c0_1, %c0_2] : memref<16x128xf32, #tpu.memory_space<vmem>>, vector<16x128xf32>
    %cst = arith.constant dense<0.000000e+00> : vector<64x128xf32>
    %2 = tpu.matmul %0, %1, %cst {dimension_numbers = #tpu.dot_dimension_numbers<[1], [0], [0], [1], [0, 0, 1, 1], [], []>} : vector<64x16xf32>, vector<16x128xf32>, vector<64x128xf32> -> vector<64x128xf32>
    %c0_3 = arith.constant 0 : index
    %c0_4 = arith.constant 0 : index
    %3 = vector.load %arg3[%c0_3, %c0_4] : memref<1x128xf32, #tpu.memory_space<vmem>>, vector<1x128xf32>
    %4 = vector.broadcast %3 : vector<1x128xf32> to vector<64x128xf32>
    %5 = arith.addf %2, %4 : vector<64x128xf32>
    %cst_5 = arith.constant 0.000000e+00 : f32
    %6 = vector.broadcast %cst_5 : f32 to vector<64x128xf32>
    %7 = arith.maximumf %5, %6 : vector<64x128xf32>
    %c0_6 = arith.constant 0 : index
    %c0_7 = arith.constant 0 : index
    %8 = vector.load %arg4[%c0_6, %c0_7] : memref<128x128xf32, #tpu.memory_space<vmem>>, vector<128x128xf32>
    %cst_8 = arith.constant dense<0.000000e+00> : vector<64x128xf32>
    %9 = tpu.matmul %7, %8, %cst_8 {dimension_numbers = #tpu.dot_dimension_numbers<[1], [0], [0], [1], [0, 0, 1, 1], [], []>} : vector<64x128xf32>, vector<128x128xf32>, vector<64x128xf32> -> vector<64x128xf32>
    %c0_9 = arith.constant 0 : index
    %c0_10 = arith.constant 0 : index
    %10 = vector.load %arg5[%c0_9, %c0_10] : memref<1x128xf32, #tpu.memory_space<vmem>>, vector<1x128xf32>
    %11 = vector.broadcast %10 : vector<1x128xf32> to vector<64x128xf32>
    %12 = arith.addf %9, %11 : vector<64x128xf32>
    %cst_11 = arith.constant 0.000000e+00 : f32
    %13 = vector.broadcast %cst_11 : f32 to vector<64x128xf32>
    %14 = arith.maximumf %12, %13 : vector<64x128xf32>
    %c0_12 = arith.constant 0 : index
    %c0_13 = arith.constant 0 : index
    %15 = vector.load %arg6[%c0_12, %c0_13] : memref<128x16xf32, #tpu.memory_space<vmem>>, vector<128x16xf32>
    %cst_14 = arith.constant dense<0.000000e+00> : vector<64x16xf32>
    %16 = tpu.matmul %14, %15, %cst_14 {dimension_numbers = #tpu.dot_dimension_numbers<[1], [0], [0], [1], [0, 0, 1, 1], [], []>} : vector<64x128xf32>, vector<128x16xf32>, vector<64x16xf32> -> vector<64x16xf32>
    %c0_15 = arith.constant 0 : index
    %c0_16 = arith.constant 0 : index
    %17 = vector.load %arg7[%c0_15, %c0_16] : memref<1x16xf32, #tpu.memory_space<vmem>>, vector<1x16xf32>
    %18 = vector.broadcast %17 : vector<1x16xf32> to vector<64x16xf32>
    %19 = arith.addf %16, %18 : vector<64x16xf32>
    %c0_17 = arith.constant 0 : index
    %c0_18 = arith.constant 0 : index
    %20 = vector.load %arg8[%c0_17, %c0_18] : memref<64x16xf32, #tpu.memory_space<vmem>>, vector<64x16xf32>
    tpu.vector_store %arg8[%c0_17, %c0_18], %19 {strides = array<i32>} : memref<64x16xf32, #tpu.memory_space<vmem>>, vector<64x16xf32>,
    return
  }
  func.func @transform_0(%arg0: i32) -> (i32, i32) {
    %c0_i32 = arith.constant 0 : i32
    %c0_i32_0 = arith.constant 0 : i32
    return %arg0, %c0_i32 : i32, i32
  }
  func.func @transform_1(%arg0: i32) -> (i32, i32) {
    %c0_i32 = arith.constant 0 : i32
    %c0_i32_0 = arith.constant 0 : i32
    %c0_i32_1 = arith.constant 0 : i32
    return %c0_i32, %c0_i32_0 : i32, i32
  }
  func.func @transform_2(%arg0: i32) -> (i32, i32) {
    %c0_i32 = arith.constant 0 : i32
    %c0_i32_0 = arith.constant 0 : i32
    %c0_i32_1 = arith.constant 0 : i32
    return %c0_i32, %c0_i32_0 : i32, i32
  }
  func.func @transform_3(%arg0: i32) -> (i32, i32) {
    %c0_i32 = arith.constant 0 : i32
    %c0_i32_0 = arith.constant 0 : i32
    %c0_i32_1 = arith.constant 0 : i32
    return %c0_i32, %c0_i32_0 : i32, i32
  }
  func.func @transform_4(%arg0: i32) -> (i32, i32) {
    %c0_i32 = arith.constant 0 : i32
    %c0_i32_0 = arith.constant 0 : i32
    %c0_i32_1 = arith.constant 0 : i32
    return %c0_i32, %c0_i32_0 : i32, i32
  }
  func.func @transform_5(%arg0: i32) -> (i32, i32) {
    %c0_i32 = arith.constant 0 : i32
    %c0_i32_0 = arith.constant 0 : i32
    %c0_i32_1 = arith.constant 0 : i32
    return %c0_i32, %c0_i32_0 : i32, i32
  }
  func.func @transform_6(%arg0: i32) -> (i32, i32) {
    %c0_i32 = arith.constant 0 : i32
    %c0_i32_0 = arith.constant 0 : i32
    %c0_i32_1 = arith.constant 0 : i32
    return %c0_i32, %c0_i32_0 : i32, i32
  }
  func.func @transform_7(%arg0: i32) -> (i32, i32) {
    %c0_i32 = arith.constant 0 : i32
    %c0_i32_0 = arith.constant 0 : i32
    return %arg0, %c0_i32 : i32, i32
  }
}

</mosaic_0001>

<llo_original>
// kernel: _eqnn_forward.1
$region0: #{_eqnn_forward.1}
  #allocation0 [shape = 'u32[]', space=smem, size = 0x4, offset = 0x4, fixed_abs, tag = 'smem constant byte address 0x4 - core index']
  #allocation1 [shape = 'u32[144,128]{1,0:T(1,128)}', space=vmem, size = 0x12000, scoped, tag = 'internal scratch']
  %s0 = inlined_call_operand.vmem [shape: f32[64,16], index: 0, kind: input, shape index: {}]
  %s1 = inlined_call_operand.vmem [shape: f32[16,128], index: 1, kind: input, shape index: {}]
  %s2 = inlined_call_operand.vmem [shape: f32[1,128], index: 2, kind: input, shape index: {}]
  %s3 = inlined_call_operand.vmem [shape: f32[128,128], index: 3, kind: input, shape index: {}]
  %s4 = inlined_call_operand.vmem [shape: f32[1,128], index: 4, kind: input, shape index: {}]
  %s5 = inlined_call_operand.vmem [shape: f32[128,16], index: 5, kind: input, shape index: {}]
  %s6 = inlined_call_operand.vmem [shape: f32[1,16], index: 6, kind: input, shape index: {}]
  %s7 = inlined_call_operand.vmem [shape: f32[64,16], index: 7, kind: output, shape index: {}]
  %s8 = sld [smem:[#allocation0]]
  $region38: #{_eqnn_forward.1} parent=0
    _
  %s10 = ssub.s32 1, %s8
  %s11 = scalar_select 0, %s10, %s8
  // Predicated region
  $region2: #{_eqnn_forward.1} parent=0 // pred_check
    _
  $region3: #{_eqnn_forward.1} parent=0 // pred_check_branch
    %13 = sbr.rel (0) target = $region5
  $region4: #{_eqnn_forward.1} parent=0 // pred_region
    _
  $region5: #{_eqnn_forward.1} parent=0 // pred_fallthru
    _
  // Predicated region
  $region6: #{_eqnn_forward.1} parent=0 // pred_check
    _
  $region7: #{_eqnn_forward.1} parent=0 // pred_check_branch
    %15 = sbr.rel (0) target = $region9
  $region8: #{_eqnn_forward.1} parent=0 // pred_region
    _
  $region9: #{_eqnn_forward.1} parent=0 // pred_fallthru
    _
  // Predicated region
  $region10: #{_eqnn_forward.1} parent=0 // pred_check
    _
  $region11: #{_eqnn_forward.1} parent=0 // pred_check_branch
    %17 = sbr.rel (0) target = $region13
  $region12: #{_eqnn_forward.1} parent=0 // pred_region
    _
  $region13: #{_eqnn_forward.1} parent=0 // pred_fallthru
    _
  // Predicated region
  $region14: #{_eqnn_forward.1} parent=0 // pred_check
    _
  $region15: #{_eqnn_forward.1} parent=0 // pred_check_branch
    %19 = sbr.rel (0) target = $region17
  $region16: #{_eqnn_forward.1} parent=0 // pred_region
    _
  $region17: #{_eqnn_forward.1} parent=0 // pred_fallthru
    _
  // Predicated region
  $region18: #{_eqnn_forward.1} parent=0 // pred_check
    _
  $region19: #{_eqnn_forward.1} parent=0 // pred_check_branch
    %21 = sbr.rel (0) target = $region21
  $region20: #{_eqnn_forward.1} parent=0 // pred_region
    _
  $region21: #{_eqnn_forward.1} parent=0 // pred_fallthru
    _
  // Predicated region
  $region22: #{_eqnn_forward.1} parent=0 // pred_check
    _
  $region23: #{_eqnn_forward.1} parent=0 // pred_check_branch
    %23 = sbr.rel (0) target = $region25
  $region24: #{_eqnn_forward.1} parent=0 // pred_region
    _
  $region25: #{_eqnn_forward.1} parent=0 // pred_fallthru
    _
  // Predicated region
  $region26: #{_eqnn_forward.1} parent=0 // pred_check
    _
  $region27: #{_eqnn_forward.1} parent=0 // pred_check_branch
    %25 = sbr.rel (0) target = $region29
  $region28: #{_eqnn_forward.1} parent=0 // pred_region
    _
  $region29: #{_eqnn_forward.1} parent=0 // pred_fallthru
    _
  %v26 = vld [vmem:[%s0] sm:$0xff]
  %v27 = vld [vmem:[%s0 + $0x8] sm:$0xff]
  %v28 = vld [vmem:[%s0 + $0x10] sm:$0xff]
  %v29 = vld [vmem:[%s0 + $0x18] sm:$0xff]
  %v30 = vld [vmem:[%s0 + $0x20] sm:$0xff]
  %v31 = vld [vmem:[%s0 + $0x28] sm:$0xff]
  %v32 = vld [vmem:[%s0 + $0x30] sm:$0xff]
  %v33 = vld [vmem:[%s0 + $0x38] sm:$0xff]
  %v34 = vld [vmem:[%s1] sm:$0xff]
  %v35 = vld [vmem:[%s1 + $0x8] sm:$0xff]
  %v36 = vld [vmem:[%s2] sm:$0x1]
  %v38 = vlaneseq
  %v39 = vshrl.u32 %v38, 7
  %v40 = vsub.s32 0, %v39
  %v41 = vrot.slane %v36, %v40
  %vm43 = vcmask 130048
  %v45 = vsel %vm43, %v26, 0
  %v48 = vsel %vm43, %v27, 0
  %v51 = vsel %vm43, %v28, 0
  %v54 = vsel %vm43, %v29, 0
  %v57 = vsel %vm43, %v30, 0
  %v60 = vsel %vm43, %v31, 0
  %v63 = vsel %vm43, %v32, 0
  %v66 = vsel %vm43, %v33, 0
  %68 = vmatprep.subr.mxu0 0.0
  %69 = vmatpush1.msra.mxu0 0.0
  %70 = vmatprep.subr.mxu0 0.0
  %71 = vmatpush1.msra.mxu0 0.0
  %72 = vmatprep.subr.mxu0 0.0
  %73 = vmatpush1.msra.mxu0 0.0
  %74 = vmatprep.subr.mxu0 0.0
  %75 = vmatpush1.msra.mxu0 0.0
  %76 = vmatprep.subr.mxu0 0.0
  %77 = vmatpush1.msra.mxu0 0.0
  %78 = vmatprep.subr.mxu0 0.0
  %79 = vmatpush1.msra.mxu0 0.0
  %80 = vmatprep.subr.mxu0 0.0
  %81 = vmatpush1.msra.mxu0 0.0
  %82 = vmatprep.subr.mxu0 0.0
  %83 = vmatpush1.msra.mxu0 0.0
  %84 = vmatprep.subr.mxu0 0.0
  %85 = vmatpush1.msra.mxu0 0.0
  %86 = vmatprep.subr.mxu0 0.0
  %87 = vmatpush1.msra.mxu0 0.0
  %88 = vmatprep.subr.mxu0 0.0
  %89 = vmatpush1.msra.mxu0 0.0
  %90 = vmatprep.subr.mxu0 0.0
  %91 = vmatpush1.msra.mxu0 0.0
  %92 = vmatprep.subr.mxu0 0.0
  %93 = vmatpush1.msra.mxu0 0.0
  %94 = vmatprep.subr.mxu0 0.0
  %95 = vmatpush1.msra.mxu0 0.0
  %96 = vmatprep.subr.mxu0 0.0
  %97 = vmatpush1.msra.mxu0 %v35
  %98 = vmatprep.subr.mxu0 0.0
  %99 = vmatpush1.msra.mxu0 %v34
  %100 = vmatprep.subr.mxu0 0.0
  %101 = vmatpush2.msra.mxu0 0.0
  %102 = vmatprep.subr.mxu0 0.0
  %103 = vmatpush2.msra.mxu0 0.0
  %104 = vmatprep.subr.mxu0 0.0
  %105 = vmatpush2.msra.mxu0 0.0
  %106 = vmatprep.subr.mxu0 0.0
  %107 = vmatpush2.msra.mxu0 0.0
  %108 = vmatprep.subr.mxu0 0.0
  %109 = vmatpush2.msra.mxu0 0.0
  %110 = vmatprep.subr.mxu0 0.0
  %111 = vmatpush2.msra.mxu0 0.0
  %112 = vmatprep.subr.mxu0 0.0
  %113 = vmatpush2.msra.mxu0 0.0
  %114 = vmatprep.subr.mxu0 0.0
  %115 = vmatpush2.msra.mxu0 0.0
  %116 = vmatprep.subr.mxu0 0.0
  %117 = vmatpush2.msra.mxu0 0.0
  %118 = vmatprep.subr.mxu0 0.0
  %119 = vmatpush2.msra.mxu0 0.0
  %120 = vmatprep.subr.mxu0 0.0
  %121 = vmatpush2.msra.mxu0 0.0
  %122 = vmatprep.subr.mxu0 0.0
  %123 = vmatpush2.msra.mxu0 0.0
  %124 = vmatprep.subr.mxu0 0.0
  %125 = vmatpush2.msra.mxu0 0.0
  %126 = vmatprep.subr.mxu0 0.0
  %127 = vmatpush2.msra.mxu0 0.0
  %128 = vmatprep.subr.mxu0 0.0
  %129 = vmatpush2.msra.mxu0 0.0
  %130 = vmatprep.subr.mxu0 0.0
  %131 = vmatpush2.msra.mxu0 0.0
  %132 = vmatprep.mubr.f32.mxu0 0.0
  %133 = vmatmul.mubr.f32.gmra.mxu0 %v45
  %v134 = vpop.f32.mrf.mxu0
  %v135 = vadd.f32 %v41, %v134
  %v136 = vpop.f32.mrf.mxu0
  %137 = vmatprep.mubr.f32.mxu0 0.0
  %138 = vmatmul.mubr.f32.gmra.mxu0 %v48
  %v139 = vpop.f32.mrf.mxu0
  %v140 = vadd.f32 %v41, %v139
  %v141 = vpop.f32.mrf.mxu0
  %142 = vmatprep.mubr.f32.mxu0 0.0
  %143 = vmatmul.mubr.f32.gmra.mxu0 %v51
  %v144 = vpop.f32.mrf.mxu0
  %v145 = vadd.f32 %v41, %v144
  %v146 = vpop.f32.mrf.mxu0
  %147 = vmatprep.mubr.f32.mxu0 0.0
  %148 = vmatmul.mubr.f32.gmra.mxu0 %v54
  %v149 = vpop.f32.mrf.mxu0
  %v150 = vadd.f32 %v41, %v149
  %v151 = vpop.f32.mrf.mxu0
  %152 = vmatprep.mubr.f32.mxu0 0.0
  %153 = vmatmul.mubr.f32.gmra.mxu0 %v57
  %v154 = vpop.f32.mrf.mxu0
  %v155 = vadd.f32 %v41, %v154
  %v156 = vpop.f32.mrf.mxu0
  %157 = vmatprep.mubr.f32.mxu0 0.0
  %158 = vmatmul.mubr.f32.gmra.mxu0 %v60
  %v159 = vpop.f32.mrf.mxu0
  %v160 = vadd.f32 %v41, %v159
  %v161 = vpop.f32.mrf.mxu0
  %162 = vmatprep.mubr.f32.mxu0 0.0
  %163 = vmatmul.mubr.f32.gmra.mxu0 %v63
  %v164 = vpop.f32.mrf.mxu0
  %v165 = vadd.f32 %v41, %v164
  %v166 = vpop.f32.mrf.mxu0
  %167 = vmatprep.mubr.f32.mxu0 0.0
  %168 = vmatmul.mubr.f32.gmra.mxu0 %v66
  %v169 = vpop.f32.mrf.mxu0
  %v170 = vadd.f32 %v41, %v169
  %v171 = vpop.f32.mrf.mxu0
  %172 = vdwg.mxu0
  %v173 = vmax.f32 %v135, 0.0
  %v174 = vmax.f32 %v140, 0.0
  %v175 = vmax.f32 %v145, 0.0
  %v176 = vmax.f32 %v150, 0.0
  %v177 = vmax.f32 %v155, 0.0
  %v178 = vmax.f32 %v160, 0.0
  %v179 = vmax.f32 %v165, 0.0
  %v180 = vmax.f32 %v170, 0.0
  %v181 = vld [vmem:[%s3] sm:$0xff]
  %v182 = vld [vmem:[%s3 + $0x8] sm:$0xff]
  %v183 = vld [vmem:[%s3 + $0x10] sm:$0xff]
  %v184 = vld [vmem:[%s3 + $0x18] sm:$0xff]
  %v185 = vld [vmem:[%s3 + $0x20] sm:$0xff]
  %v186 = vld [vmem:[%s3 + $0x28] sm:$0xff]
  %v187 = vld [vmem:[%s3 + $0x30] sm:$0xff]
  %v188 = vld [vmem:[%s3 + $0x38] sm:$0xff]
  %v189 = vld [vmem:[%s3 + $0x40] sm:$0xff]
  %v190 = vld [vmem:[%s3 + $0x48] sm:$0xff]
  %v191 = vld [vmem:[%s3 + $0x50] sm:$0xff]
  %v192 = vld [vmem:[%s3 + $0x58] sm:$0xff]
  %v193 = vld [vmem:[%s3 + $0x60] sm:$0xff]
  %v194 = vld [vmem:[%s3 + $0x68] sm:$0xff]
  %v195 = vld [vmem:[%s3 + $0x70] sm:$0xff]
  %v196 = vld [vmem:[%s3 + $0x78] sm:$0xff]
  %v197 = vld [vmem:[%s4] sm:$0x1]
  %v199 = vlaneseq
  %v200 = vshrl.u32 %v199, 7
  %v201 = vsub.s32 0, %v200
  %v202 = vrot.slane %v197, %v201
  %204 = vmatprep.subr.mxu0 0.0
  %205 = vmatpush1.msra.mxu0 %v196
  %206 = vmatprep.subr.mxu0 0.0
  %207 = vmatpush1.msra.mxu0 %v195
  %208 = vmatprep.subr.mxu0 0.0
  %209 = vmatpush1.msra.mxu0 %v194
  %210 = vmatprep.subr.mxu0 0.0
  %211 = vmatpush1.msra.mxu0 %v193
  %212 = vmatprep.subr.mxu0 0.0
  %213 = vmatpush1.msra.mxu0 %v192
  %214 = vmatprep.subr.mxu0 0.0
  %215 = vmatpush1.msra.mxu0 %v191
  %216 = vmatprep.subr.mxu0 0.0
  %217 = vmatpush1.msra.mxu0 %v190
  %218 = vmatprep.subr.mxu0 0.0
  %219 = vmatpush1.msra.mxu0 %v189
  %220 = vmatprep.subr.mxu0 0.0
  %221 = vmatpush1.msra.mxu0 %v188
  %222 = vmatprep.subr.mxu0 0.0
  %223 = vmatpush1.msra.mxu0 %v187
  %224 = vmatprep.subr.mxu0 0.0
  %225 = vmatpush1.msra.mxu0 %v186
  %226 = vmatprep.subr.mxu0 0.0
  %227 = vmatpush1.msra.mxu0 %v185
  %228 = vmatprep.subr.mxu0 0.0
  %229 = vmatpush1.msra.mxu0 %v184
  %230 = vmatprep.subr.mxu0 0.0
  %231 = vmatpush1.msra.mxu0 %v183
  %232 = vmatprep.subr.mxu0 0.0
  %233 = vmatpush1.msra.mxu0 %v182
  %234 = vmatprep.subr.mxu0 0.0
  %235 = vmatpush1.msra.mxu0 %v181
  %236 = vmatprep.subr.mxu0 0.0
  %237 = vmatpush2.msra.mxu0 0.0
  %238 = vmatprep.subr.mxu0 0.0
  %239 = vmatpush2.msra.mxu0 0.0
  %240 = vmatprep.subr.mxu0 0.0
  %241 = vmatpush2.msra.mxu0 0.0
  %242 = vmatprep.subr.mxu0 0.0
  %243 = vmatpush2.msra.mxu0 0.0
  %244 = vmatprep.subr.mxu0 0.0
  %245 = vmatpush2.msra.mxu0 0.0
  %246 = vmatprep.subr.mxu0 0.0
  %247 = vmatpush2.msra.mxu0 0.0
  %248 = vmatprep.subr.mxu0 0.0
  %249 = vmatpush2.msra.mxu0 0.0
  %250 = vmatprep.subr.mxu0 0.0
  %251 = vmatpush2.msra.mxu0 0.0
  %252 = vmatprep.subr.mxu0 0.0
  %253 = vmatpush2.msra.mxu0 0.0
  %254 = vmatprep.subr.mxu0 0.0
  %255 = vmatpush2.msra.mxu0 0.0
  %256 = vmatprep.subr.mxu0 0.0
  %257 = vmatpush2.msra.mxu0 0.0
  %258 = vmatprep.subr.mxu0 0.0
  %259 = vmatpush2.msra.mxu0 0.0
  %260 = vmatprep.subr.mxu0 0.0
  %261 = vmatpush2.msra.mxu0 0.0
  %262 = vmatprep.subr.mxu0 0.0
  %263 = vmatpush2.msra.mxu0 0.0
  %264 = vmatprep.subr.mxu0 0.0
  %265 = vmatpush2.msra.mxu0 0.0
  %266 = vmatprep.subr.mxu0 0.0
  %267 = vmatpush2.msra.mxu0 0.0
  %268 = vmatprep.mubr.f32.mxu0 0.0
  %269 = vmatmul.mubr.f32.gmra.mxu0 %v173
  %v270 = vpop.f32.mrf.mxu0
  %v271 = vadd.f32 %v202, %v270
  %v272 = vpop.f32.mrf.mxu0
  %273 = vmatprep.mubr.f32.mxu0 0.0
  %274 = vmatmul.mubr.f32.gmra.mxu0 %v174
  %v275 = vpop.f32.mrf.mxu0
  %v276 = vadd.f32 %v202, %v275
  %v277 = vpop.f32.mrf.mxu0
  %278 = vmatprep.mubr.f32.mxu0 0.0
  %279 = vmatmul.mubr.f32.gmra.mxu0 %v175
  %v280 = vpop.f32.mrf.mxu0
  %v281 = vadd.f32 %v202, %v280
  %v282 = vpop.f32.mrf.mxu0
  %283 = vmatprep.mubr.f32.mxu0 0.0
  %284 = vmatmul.mubr.f32.gmra.mxu0 %v176
  %v285 = vpop.f32.mrf.mxu0
  %v286 = vadd.f32 %v202, %v285
  %v287 = vpop.f32.mrf.mxu0
  %288 = vmatprep.mubr.f32.mxu0 0.0
  %289 = vmatmul.mubr.f32.gmra.mxu0 %v177
  %v290 = vpop.f32.mrf.mxu0
  %v291 = vadd.f32 %v202, %v290
  %v292 = vpop.f32.mrf.mxu0
  %293 = vmatprep.mubr.f32.mxu0 0.0
  %294 = vmatmul.mubr.f32.gmra.mxu0 %v178
  %v295 = vpop.f32.mrf.mxu0
  %v296 = vadd.f32 %v202, %v295
  %v297 = vpop.f32.mrf.mxu0
  %298 = vmatprep.mubr.f32.mxu0 0.0
  %299 = vmatmul.mubr.f32.gmra.mxu0 %v179
  %v300 = vpop.f32.mrf.mxu0
  %v301 = vadd.f32 %v202, %v300
  %v302 = vpop.f32.mrf.mxu0
  %303 = vmatprep.mubr.f32.mxu0 0.0
  %304 = vmatmul.mubr.f32.gmra.mxu0 %v180
  %v305 = vpop.f32.mrf.mxu0
  %v306 = vadd.f32 %v202, %v305
  %v307 = vpop.f32.mrf.mxu0
  %308 = vdwg.mxu0
  %v309 = vmax.f32 %v271, 0.0
  %v310 = vmax.f32 %v276, 0.0
  %v311 = vmax.f32 %v281, 0.0
  %v312 = vmax.f32 %v286, 0.0
  %v313 = vmax.f32 %v291, 0.0
  %v314 = vmax.f32 %v296, 0.0
  %v315 = vmax.f32 %v301, 0.0
  %v316 = vmax.f32 %v306, 0.0
  %v317 = vld [vmem:[%s5] sm:$0xff]
  %v318 = vld [vmem:[%s5 + $0x8] sm:$0xff]
  %v319 = vld [vmem:[%s5 + $0x10] sm:$0xff]
  %v320 = vld [vmem:[%s5 + $0x18] sm:$0xff]
  %v321 = vld [vmem:[%s5 + $0x20] sm:$0xff]
  %v322 = vld [vmem:[%s5 + $0x28] sm:$0xff]
  %v323 = vld [vmem:[%s5 + $0x30] sm:$0xff]
  %v324 = vld [vmem:[%s5 + $0x38] sm:$0xff]
  %v325 = vld [vmem:[%s5 + $0x40] sm:$0xff]
  %v326 = vld [vmem:[%s5 + $0x48] sm:$0xff]
  %v327 = vld [vmem:[%s5 + $0x50] sm:$0xff]
  %v328 = vld [vmem:[%s5 + $0x58] sm:$0xff]
  %v329 = vld [vmem:[%s5 + $0x60] sm:$0xff]
  %v330 = vld [vmem:[%s5 + $0x68] sm:$0xff]
  %v331 = vld [vmem:[%s5 + $0x70] sm:$0xff]
  %v332 = vld [vmem:[%s5 + $0x78] sm:$0xff]
  %v333 = vld [vmem:[%s6] sm:$0x1]
  %v335 = vlaneseq
  %v336 = vshrl.u32 %v335, 7
  %v337 = vsub.s32 0, %v336
  %v338 = vrot.slane %v333, %v337
  %340 = vmatprep.subr.mxu0 0.0
  %341 = vmatpush1.msra.mxu0 %v332
  %342 = vmatprep.subr.mxu0 0.0
  %343 = vmatpush1.msra.mxu0 %v331
  %344 = vmatprep.subr.mxu0 0.0
  %345 = vmatpush1.msra.mxu0 %v330
  %346 = vmatprep.subr.mxu0 0.0
  %347 = vmatpush1.msra.mxu0 %v329
  %348 = vmatprep.subr.mxu0 0.0
  %349 = vmatpush1.msra.mxu0 %v328
  %350 = vmatprep.subr.mxu0 0.0
  %351 = vmatpush1.msra.mxu0 %v327
  %352 = vmatprep.subr.mxu0 0.0
  %353 = vmatpush1.msra.mxu0 %v326
  %354 = vmatprep.subr.mxu0 0.0
  %355 = vmatpush1.msra.mxu0 %v325
  %356 = vmatprep.subr.mxu0 0.0
  %357 = vmatpush1.msra.mxu0 %v324
  %358 = vmatprep.subr.mxu0 0.0
  %359 = vmatpush1.msra.mxu0 %v323
  %360 = vmatprep.subr.mxu0 0.0
  %361 = vmatpush1.msra.mxu0 %v322
  %362 = vmatprep.subr.mxu0 0.0
  %363 = vmatpush1.msra.mxu0 %v321
  %364 = vmatprep.subr.mxu0 0.0
  %365 = vmatpush1.msra.mxu0 %v320
  %366 = vmatprep.subr.mxu0 0.0
  %367 = vmatpush1.msra.mxu0 %v319
  %368 = vmatprep.subr.mxu0 0.0
  %369 = vmatpush1.msra.mxu0 %v318
  %370 = vmatprep.subr.mxu0 0.0
  %371 = vmatpush1.msra.mxu0 %v317
  %372 = vmatprep.subr.mxu0 0.0
  %373 = vmatpush2.msra.mxu0 0.0
  %374 = vmatprep.subr.mxu0 0.0
  %375 = vmatpush2.msra.mxu0 0.0
  %376 = vmatprep.subr.mxu0 0.0
  %377 = vmatpush2.msra.mxu0 0.0
  %378 = vmatprep.subr.mxu0 0.0
  %379 = vmatpush2.msra.mxu0 0.0
  %380 = vmatprep.subr.mxu0 0.0
  %381 = vmatpush2.msra.mxu0 0.0
  %382 = vmatprep.subr.mxu0 0.0
  %383 = vmatpush2.msra.mxu0 0.0
  %384 = vmatprep.subr.mxu0 0.0
  %385 = vmatpush2.msra.mxu0 0.0
  %386 = vmatprep.subr.mxu0 0.0
  %387 = vmatpush2.msra.mxu0 0.0
  %388 = vmatprep.subr.mxu0 0.0
  %389 = vmatpush2.msra.mxu0 0.0
  %390 = vmatprep.subr.mxu0 0.0
  %391 = vmatpush2.msra.mxu0 0.0
  %392 = vmatprep.subr.mxu0 0.0
  %393 = vmatpush2.msra.mxu0 0.0
  %394 = vmatprep.subr.mxu0 0.0
  %395 = vmatpush2.msra.mxu0 0.0
  %396 = vmatprep.subr.mxu0 0.0
  %397 = vmatpush2.msra.mxu0 0.0
  %398 = vmatprep.subr.mxu0 0.0
  %399 = vmatpush2.msra.mxu0 0.0
  %400 = vmatprep.subr.mxu0 0.0
  %401 = vmatpush2.msra.mxu0 0.0
  %402 = vmatprep.subr.mxu0 0.0
  %403 = vmatpush2.msra.mxu0 0.0
  %404 = vmatprep.mubr.f32.mxu0 0.0
  %405 = vmatmul.mubr.f32.gmra.mxu0 %v309
  %v406 = vpop.f32.mrf.mxu0
  %v407 = vadd.f32 %v338, %v406
  %v408 = vpop.f32.mrf.mxu0
  %409 = vmatprep.mubr.f32.mxu0 0.0
  %410 = vmatmul.mubr.f32.gmra.mxu0 %v310
  %v411 = vpop.f32.mrf.mxu0
  %v412 = vadd.f32 %v338, %v411
  %v413 = vpop.f32.mrf.mxu0
  %414 = vmatprep.mubr.f32.mxu0 0.0
  %415 = vmatmul.mubr.f32.gmra.mxu0 %v311
  %v416 = vpop.f32.mrf.mxu0
  %v417 = vadd.f32 %v338, %v416
  %v418 = vpop.f32.mrf.mxu0
  %419 = vmatprep.mubr.f32.mxu0 0.0
  %420 = vmatmul.mubr.f32.gmra.mxu0 %v312
  %v421 = vpop.f32.mrf.mxu0
  %v422 = vadd.f32 %v338, %v421
  %v423 = vpop.f32.mrf.mxu0
  %424 = vmatprep.mubr.f32.mxu0 0.0
  %425 = vmatmul.mubr.f32.gmra.mxu0 %v313
  %v426 = vpop.f32.mrf.mxu0
  %v427 = vadd.f32 %v338, %v426
  %v428 = vpop.f32.mrf.mxu0
  %429 = vmatprep.mubr.f32.mxu0 0.0
  %430 = vmatmul.mubr.f32.gmra.mxu0 %v314
  %v431 = vpop.f32.mrf.mxu0
  %v432 = vadd.f32 %v338, %v431
  %v433 = vpop.f32.mrf.mxu0
  %434 = vmatprep.mubr.f32.mxu0 0.0
  %435 = vmatmul.mubr.f32.gmra.mxu0 %v315
  %v436 = vpop.f32.mrf.mxu0
  %v437 = vadd.f32 %v338, %v436
  %v438 = vpop.f32.mrf.mxu0
  %439 = vmatprep.mubr.f32.mxu0 0.0
  %440 = vmatmul.mubr.f32.gmra.mxu0 %v316
  %v441 = vpop.f32.mrf.mxu0
  %v442 = vadd.f32 %v338, %v441
  %v443 = vpop.f32.mrf.mxu0
  %444 = vdwg.mxu0
  %445 = vst.msk [vmem:[%s7] sm:$0xff] %vm43, %v407
  %446 = vst.msk [vmem:[%s7 + $0x8] sm:$0xff] %vm43, %v412
  %447 = vst.msk [vmem:[%s7 + $0x10] sm:$0xff] %vm43, %v417
  %448 = vst.msk [vmem:[%s7 + $0x18] sm:$0xff] %vm43, %v422
  %449 = vst.msk [vmem:[%s7 + $0x20] sm:$0xff] %vm43, %v427
  %450 = vst.msk [vmem:[%s7 + $0x28] sm:$0xff] %vm43, %v432
  %451 = vst.msk [vmem:[%s7 + $0x30] sm:$0xff] %vm43, %v437
  %452 = vst.msk [vmem:[%s7 + $0x38] sm:$0xff] %vm43, %v442
  // Predicated region
  $region30: #{_eqnn_forward.1} parent=0 // pred_check
    _
  $region31: #{_eqnn_forward.1} parent=0 // pred_check_branch
    %454 = sbr.rel (0) target = $region33
  $region32: #{_eqnn_forward.1} parent=0 // pred_region
    _
  $region33: #{_eqnn_forward.1} parent=0 // pred_fallthru
    _
  // Predicated region
  $region34: #{_eqnn_forward.1} parent=0 // pred_check
    _
  $region35: #{_eqnn_forward.1} parent=0 // pred_check_branch
    %456 = sbr.rel (0) target = $region37
  $region36: #{_eqnn_forward.1} parent=0 // pred_region
    _
  $region37: #{_eqnn_forward.1} parent=0 // pred_fallthru
    _

</llo_original>
